<compile_context>
chip_gen: v6e
topology: v6e:2x2x1
jax: 0.10.0
libtpu: 0.0.40
codegen_flags: <defaults>
</compile_context>

<pallas_src>
import math

import jax
import jax.numpy as jnp
from jax.experimental import pallas as pl
from jax.experimental.pallas import tpu as pltpu

NEG = -1.0e30                    # finite stand-in for -inf (NaN-free logsumexp)
VMEM_LIMIT = 48 * 1024 * 1024    # safe across v5e/v6e (128 MiB) and v7x (64 MiB)
BB = 8                           # batch rows per DP block (= sublane count)
UNROLL = 8                       # statically-unrolled frames per DP chunk


def _ceil_to(x, m):
    return ((x + m - 1) // m) * m


def _resident_spec(block_shape, index_map):
    """BlockSpec for blocks whose index never changes: single-buffer them."""
    try:
        return pl.BlockSpec(block_shape, index_map, pipeline_mode=pl.Buffered(1))
    except (TypeError, AttributeError):      # older jax: default double buffer
        return pl.BlockSpec(block_shape, index_map)


# --------------------------------------------------------------------------
# Kernel 1: fused projection + log_softmax + label-gathered emissions
# --------------------------------------------------------------------------
def emit_kernel(x_ref, w_ref, b_ref, wext_ref, bext_ref, em_ref):
    # x:    (1, tile_t, D) bf16
    # w:    (D, Vp) bf16           (vocab zero-padded to Vp)
    # b:    (1, Vp) f32            (padded classes = NEG -> ignored by lse)
    # wext: (1, D, S) bf16         (= W[:, ext[b]])
    # bext: (1, 1, S) f32          (= b[ext[b]])
    # em:   (1, tile_t, S) f32     (= log_softmax(xW+b)[:, ext[b]])
    x = x_ref[0]                                                   # (tile_t, D)
    logits = jnp.dot(x, w_ref[...],
                     preferred_element_type=jnp.float32) + b_ref[...]
    m = jnp.max(logits, axis=-1, keepdims=True)
    lse = m + jnp.log(jnp.sum(jnp.exp(logits - m), axis=-1, keepdims=True))
    g = jnp.dot(x, wext_ref[0],
                preferred_element_type=jnp.float32) + bext_ref[0]  # (tile_t, S)
    em_ref[0] = (g - lse).astype(em_ref.dtype)


def emissions_pallas(hs_bf16, Wp, bp, wext, bext, tile_t):
    B_pad, T_pad, D = hs_bf16.shape
    Vp = Wp.shape[1]
    S = wext.shape[2]
    nt = T_pad // tile_t
    return pl.pallas_call(
        emit_kernel,
        out_shape=jax.ShapeDtypeStruct((B_pad, T_pad, S), jnp.float32),
        grid=(B_pad, nt),
        in_specs=[
            pl.BlockSpec((1, tile_t, D), lambda b, t: (b, t, 0)),
            _resident_spec((D, Vp), lambda b, t: (0, 0)),       # weight resident
            _resident_spec((1, Vp), lambda b, t: (0, 0)),       # bias resident
            pl.BlockSpec((1, D, S), lambda b, t: (b, 0, 0)),    # W[:, ext[b]]
            pl.BlockSpec((1, 1, S), lambda b, t: (b, 0, 0)),    # b[ext[b]]
        ],
        out_specs=pl.BlockSpec((1, tile_t, S), lambda b, t: (b, t, 0)),
        compiler_params=pltpu.CompilerParams(
            dimension_semantics=("parallel", "parallel"),
            vmem_limit_bytes=VMEM_LIMIT),
    )(hs_bf16, Wp, bp.reshape(1, Vp), wext, bext)


# --------------------------------------------------------------------------
# Kernel 2: CTC forward (alpha) DP, 8 batch rows per step on the sublanes
# --------------------------------------------------------------------------
def ctc_dp_kernel(mh_ref, lvt_ref, hl_ref, em_ref, valid_ref, final_ref,
                  skip_ref, loss_ref, alpha_ref):
    # mh/lvt: SMEM (nb,) int32 (scalar-prefetched): per-block max hlen /
    #         last valid T tile.
    # hl:     (BB, 128) int32   per-row hlen broadcast along lanes
    # em:     (tile_t, BB, S) f32   emissions (frame-major, batch on sublanes)
    # valid/final/skip: (BB, S) int32 per-row DP masks
    # loss:   (BB, 128) f32     per-row loss (lane-dense)
    # alpha:  (BB, S) f32 VMEM  persistent alpha across T tiles
    b = pl.program_id(0)
    tt = pl.program_id(1)
    tile_t = em_ref.shape[0]
    bb, S = alpha_ref.shape
    neg = jnp.float32(NEG)

    s_iota = jax.lax.broadcasted_iota(jnp.int32, (bb, S), 1)
    valid = valid_ref[...] != 0
    skip_ok = skip_ref[...] != 0
    not_first = s_iota >= 1
    hlen = hl_ref[:, 0:1]                                          # (BB, 1)
    t0 = tt * tile_t

    # "virtual" alpha before frame 0: prob 1 in state 0.  Running the standard
    # recursion from it reproduces the textbook t=0 init (and hlen==0 rows).
    init = jnp.where(s_iota == 0, jnp.float32(0.0), neg)
    alpha0 = jnp.where(tt == 0, init, alpha_ref[...])

    n_frames = jnp.clip(mh_ref[b] - t0, 0, tile_t)                 # scalar
    n_chunks = (n_frames + UNROLL - 1) // UNROLL

    def frame(alpha, lt):
        a1 = jnp.where(not_first, pltpu.roll(alpha, 1, axis=1), neg)   # s-1
        a2 = jnp.where(skip_ok, pltpu.roll(alpha, 2, axis=1), neg)     # s-2
        m = jnp.maximum(jnp.maximum(alpha, a1), a2)
        lse = m + jnp.log(jnp.exp(alpha - m) + jnp.exp(a1 - m)
                          + jnp.exp(a2 - m))
        new = jnp.where(valid, lse + em_ref[lt], neg)
        live = (t0 + lt) < hlen                                    # (BB, 1)
        return jnp.where(live, new, alpha)

    def chunk(ci, alpha):
        base = ci * UNROLL
        for j in range(UNROLL):                                    # static unroll
            alpha = frame(alpha, base + j)
        return alpha

    alpha = jax.lax.fori_loop(0, n_chunks, chunk, alpha0)
    alpha_ref[...] = alpha                                         # persist

    @pl.when(tt == pl.num_programs(1) - 1)
    def _():
        fin = jnp.where(final_ref[...] != 0, alpha, neg)
        mmax = jnp.max(fin, axis=1, keepdims=True)
        ll = mmax + jnp.log(jnp.sum(jnp.exp(fin - mmax), axis=1, keepdims=True))
        lb = -ll                                                   # (BB, 1)
        # zero_infinity=True: impossible alignments contribute zero.
        lb = jnp.where(jnp.isnan(lb) | (lb > 1e29), jnp.float32(0.0), lb)
        loss_ref[...] = jnp.broadcast_to(lb, loss_ref.shape)


def ctc_dp_pallas(mh, lvt, hl_lanes, em_tbs, valid, final, skip, tile_t):
    T_pad, B_pad, S = em_tbs.shape
    nb = B_pad // BB
    nt = T_pad // tile_t

    def bmap(b, t, mh_r, lvt_r):
        return (b, 0)

    grid_spec = pltpu.PrefetchScalarGridSpec(
        num_scalar_prefetch=2,
        grid=(nb, nt),
        in_specs=[
            pl.BlockSpec((BB, 128), bmap),                          # hlens
            pl.BlockSpec((tile_t, BB, S),
                         lambda b, t, mh_r, lvt_r:
                         (jnp.minimum(t, lvt_r[b]), b, 0)),         # emissions
            pl.BlockSpec((BB, S), lambda b, t, mh_r, lvt_r: (b, 0)),  # valid
            pl.BlockSpec((BB, S), lambda b, t, mh_r, lvt_r: (b, 0)),  # final
            pl.BlockSpec((BB, S), lambda b, t, mh_r, lvt_r: (b, 0)),  # skip
        ],
        out_specs=pl.BlockSpec((BB, 128), bmap),
        scratch_shapes=[pltpu.VMEM((BB, S), jnp.float32)],          # alpha
    )
    return pl.pallas_call(
        ctc_dp_kernel,
        out_shape=jax.ShapeDtypeStruct((B_pad, 128), jnp.float32),
        grid_spec=grid_spec,
        compiler_params=pltpu.CompilerParams(
            dimension_semantics=("parallel", "arbitrary"),
            vmem_limit_bytes=VMEM_LIMIT),
    )(mh, lvt, hl_lanes, em_tbs, valid, final, skip)


# --------------------------------------------------------------------------
# Glue: extended (blank-interleaved) labels and DP masks, S padded to 128
# --------------------------------------------------------------------------
def build_ctc_masks(ys_pad, ys_lens, blank=0):
    B, Lmax = ys_pad.shape
    s_raw = 2 * Lmax + 1
    S = max(128, _ceil_to(s_raw, 128))
    s = jnp.arange(S)
    is_label = (s % 2 == 1) & (s < s_raw)
    lab_idx = jnp.clip(jnp.where(is_label, (s - 1) // 2, 0), 0, max(Lmax - 1, 0))
    ext = jnp.where(is_label[None, :], ys_pad[:, lab_idx], blank)
    sv = 2 * ys_lens[:, None] + 1                      # valid extended length
    in_len = s[None, :] < sv
    ext = jnp.where(in_len, ext, blank)
    ext_m2 = jnp.roll(ext, 2, axis=1)
    skip = is_label[None, :] & (s[None, :] >= 2) & (ext != ext_m2) & in_len
    final = (s[None, :] == sv - 1) | (s[None, :] == sv - 2)
    return (ext.astype(jnp.int32), in_len.astype(jnp.int32),
            skip.astype(jnp.int32), final.astype(jnp.int32))


# --------------------------------------------------------------------------
# Module wrapper (builtin CTC, reduce=True, zero_infinity=True)
# --------------------------------------------------------------------------
class CTCPallas:
    def __init__(self, odim, encoder_output_size, key, dropout_rate=0.0):
        eprojs = encoder_output_size
        self.odim = odim
        self.eprojs = eprojs
        self.dropout_rate = dropout_rate
        k1, k2 = jax.random.split(key)
        bound = 1.0 / math.sqrt(eprojs)
        W = jax.random.uniform(k1, (eprojs, odim), jnp.float32, -bound, bound)
        b = jax.random.uniform(k2, (odim,), jnp.float32, -bound, bound)
        Vp = _ceil_to(odim, 128)
        self.Vp = Vp
        # bf16 weights for the MXU; vocab padded lane-dense, padded logits
        # forced to NEG through the bias so the logsumexp ignores them.
        self.W_bf16 = W.astype(jnp.bfloat16)                         # (D, odim)
        self.Wp = jnp.pad(W, ((0, 0), (0, Vp - odim))).astype(jnp.bfloat16)
        self.bp = jnp.pad(b, (0, Vp - odim), constant_values=NEG)    # (Vp,) f32
        self.b = b                                                   # (odim,)

    def __call__(self, hs_pad, hlens, ys_pad, ys_lens):
        # dropout_rate == 0.0 -> identity.
        # TODO(synk): training-mode dropout (rate > 0) not implemented.
        B, T, D = hs_pad.shape
        B_pad = _ceil_to(B, BB)
        tile_t = 256 if T > 256 else _ceil_to(T, UNROLL)
        T_pad = _ceil_to(T, tile_t)
        nt = T_pad // tile_t
        nb = B_pad // BB

        hs = jnp.pad(hs_pad.astype(jnp.bfloat16),
                     ((0, B_pad - B), (0, T_pad - T), (0, 0)))
        hl = jnp.pad(hlens.astype(jnp.int32), (0, B_pad - B))
        yl = jnp.pad(ys_lens.astype(jnp.int32), (0, B_pad - B))
        yp = jnp.pad(ys_pad, ((0, B_pad - B), (0, 0)))

        ext, valid, skip, final = build_ctc_masks(yp, yl)
        S = ext.shape[1]

        # Per-batch pre-gathered weight slice: em = x @ W[:, ext] + b[ext] - lse
        wext = jnp.transpose(jnp.take(self.W_bf16, ext, axis=1), (1, 0, 2))
        bext = jnp.take(self.b, ext, axis=0).reshape(B_pad, 1, S)

        em = emissions_pallas(hs, self.Wp, self.bp, wext, bext, tile_t)
        # (T, B, S) so the DP keeps 8 batch rows on the 8 vreg sublanes.
        # TODO(synk): fuse this transpose into the emission kernel's stores.
        em_tbs = jnp.transpose(em, (1, 0, 2))

        hl_lanes = jnp.broadcast_to(hl[:, None], (B_pad, 128)).astype(jnp.int32)
        mh = jnp.max(hl.reshape(nb, BB), axis=1).astype(jnp.int32)
        lvt = jnp.clip((mh + tile_t - 1) // tile_t - 1, 0, nt - 1).astype(jnp.int32)

        loss_all = ctc_dp_pallas(mh, lvt, hl_lanes, em_tbs, valid, final,
                                 skip, tile_t)
        per_loss = loss_all[:B, 0]
        loss = per_loss.sum() / B              # reduce=True: loss.sum()/batch
        return loss.astype(hs_pad.dtype)


if __name__ == "__main__":
    key = jax.random.PRNGKey(0)
    B, T, D, V, Lmax = 2, 16, 32, 8, 4         # V = odim (includes blank=0)
    k1, k2, k3 = jax.random.split(key, 3)

    hs_pad = jax.random.normal(k1, (B, T, D), jnp.float32)
    hlens = jnp.array([16, 12], jnp.int32)
    ys_lens = jnp.array([4, 3], jnp.int32)
    ys_pad = jax.random.randint(k2, (B, Lmax), 1, V)          # labels 1..V-1
    ys_pad = jnp.where(jnp.arange(Lmax)[None, :] < ys_lens[:, None],
                       ys_pad, -1)                            # pad with -1

    ctc = CTCPallas(odim=V, encoder_output_size=D, key=k3)
    loss = ctc(hs_pad, hlens, ys_pad, ys_lens)
    jax.block_until_ready(loss)
    assert bool(jnp.isfinite(loss))
    print("KERNEL_OK")
</pallas_src>

<mosaic_0001>
module attributes {stable_mosaic.version = 11 : i64} {
  func.func @emit_kernel(%arg0: i32, %arg1: i32, %arg2: memref<1x16x32xbf16, #tpu.memory_space<vmem>>, %arg3: memref<32x128xbf16, #tpu.memory_space<vmem>>, %arg4: memref<1x128xf32, #tpu.memory_space<vmem>>, %arg5: memref<1x32x128xbf16, #tpu.memory_space<vmem>>, %arg6: memref<1x1x128xf32, #tpu.memory_space<vmem>>, %arg7: memref<1x16x128xf32, #tpu.memory_space<vmem>>) attributes {dimension_semantics = [#tpu.dimension_semantics<parallel>, #tpu.dimension_semantics<parallel>], iteration_bounds = array<i64: 8, 1>, scalar_prefetch = 0 : i64, scratch_operands = 0 : i64, tpu.core_type = #tpu.core_type<tc>, window_params = [{transform_indices = @transform_0, window_bounds = array<i64: 1, 16, 32>}, {pipeline_mode = #tpu.pipeline_mode<synchronous>, transform_indices = @transform_1, window_bounds = array<i64: 32, 128>}, {pipeline_mode = #tpu.pipeline_mode<synchronous>, transform_indices = @transform_2, window_bounds = array<i64: 1, 128>}, {transform_indices = @transform_3, window_bounds = array<i64: 1, 32, 128>}, {transform_indices = @transform_4, window_bounds = array<i64: 1, 1, 128>}, {transform_indices = @transform_5, window_bounds = array<i64: 1, 16, 128>}]} {
    %c0 = arith.constant 0 : index
    %c0_0 = arith.constant 0 : index
    %c0_1 = arith.constant 0 : index
    %0 = vector.load %arg2[%c0, %c0_0, %c0_1] : memref<1x16x32xbf16, #tpu.memory_space<vmem>>, vector<1x16x32xbf16>
    %1 = vector.shape_cast %0 : vector<1x16x32xbf16> to vector<16x32xbf16>
    %c0_2 = arith.constant 0 : index
    %c0_3 = arith.constant 0 : index
    %2 = vector.load %arg3[%c0_2, %c0_3] : memref<32x128xbf16, #tpu.memory_space<vmem>>, vector<32x128xbf16>
    %cst = arith.constant dense<0.000000e+00> : vector<16x128xf32>
    %3 = tpu.matmul %1, %2, %cst {dimension_numbers = #tpu.dot_dimension_numbers<[1], [0], [0], [1], [0, 0, 1, 1], [], []>} : vector<16x32xbf16>, vector<32x128xbf16>, vector<16x128xf32> -> vector<16x128xf32>
    %c0_4 = arith.constant 0 : index
    %c0_5 = arith.constant 0 : index
    %4 = vector.load %arg4[%c0_4, %c0_5] : memref<1x128xf32, #tpu.memory_space<vmem>>, vector<1x128xf32>
    %5 = vector.broadcast %4 : vector<1x128xf32> to vector<16x128xf32>
    %6 = arith.addf %3, %5 : vector<16x128xf32>
    %cst_6 = arith.constant dense<0xFF800000> : vector<16xf32>
    %7 = vector.multi_reduction <maximumf>, %6, %cst_6 [1] : vector<16x128xf32> to vector<16xf32>
    %8 = vector.shape_cast %7 : vector<16xf32> to vector<16x1xf32>
    %9 = vector.broadcast %8 : vector<16x1xf32> to vector<16x128xf32>
    %10 = arith.subf %6, %9 : vector<16x128xf32>
    %11 = math.exp %10 : vector<16x128xf32>
    %cst_7 = arith.constant dense<0.000000e+00> : vector<16xf32>
    %12 = vector.multi_reduction <add>, %11, %cst_7 [1] : vector<16x128xf32> to vector<16xf32>
    %13 = vector.shape_cast %12 : vector<16xf32> to vector<16x1xf32>
    %14 = math.log %13 : vector<16x1xf32>
    %15 = arith.addf %8, %14 : vector<16x1xf32>
    %c0_8 = arith.constant 0 : index
    %c0_9 = arith.constant 0 : index
    %c0_10 = arith.constant 0 : index
    %16 = vector.load %arg5[%c0_8, %c0_9, %c0_10] : memref<1x32x128xbf16, #tpu.memory_space<vmem>>, vector<1x32x128xbf16>
    %17 = vector.shape_cast %16 : vector<1x32x128xbf16> to vector<32x128xbf16>
    %cst_11 = arith.constant dense<0.000000e+00> : vector<16x128xf32>
    %18 = tpu.matmul %1, %17, %cst_11 {dimension_numbers = #tpu.dot_dimension_numbers<[1], [0], [0], [1], [0, 0, 1, 1], [], []>} : vector<16x32xbf16>, vector<32x128xbf16>, vector<16x128xf32> -> vector<16x128xf32>
    %c0_12 = arith.constant 0 : index
    %c0_13 = arith.constant 0 : index
    %c0_14 = arith.constant 0 : index
    %19 = vector.load %arg6[%c0_12, %c0_13, %c0_14] : memref<1x1x128xf32, #tpu.memory_space<vmem>>, vector<1x1x128xf32>
    %20 = vector.shape_cast %19 : vector<1x1x128xf32> to vector<1x128xf32>
    %21 = vector.broadcast %20 : vector<1x128xf32> to vector<16x128xf32>
    %22 = arith.addf %18, %21 : vector<16x128xf32>
    %23 = vector.broadcast %15 : vector<16x1xf32> to vector<16x128xf32>
    %24 = arith.subf %22, %23 : vector<16x128xf32>
    %c0_15 = arith.constant 0 : index
    %c0_16 = arith.constant 0 : index
    %c0_17 = arith.constant 0 : index
    %25 = vector.load %arg7[%c0_15, %c0_16, %c0_17] : memref<1x16x128xf32, #tpu.memory_space<vmem>>, vector<1x16x128xf32>
    %26 = vector.shape_cast %25 : vector<1x16x128xf32> to vector<16x128xf32>
    %27 = vector.shape_cast %24 : vector<16x128xf32> to vector<1x16x128xf32>
    tpu.vector_store %arg7[%c0_15, %c0_16, %c0_17], %27 {strides = array<i32>} : memref<1x16x128xf32, #tpu.memory_space<vmem>>, vector<1x16x128xf32>,
    return
  }
  func.func @transform_0(%arg0: i32, %arg1: i32) -> (i32, i32, i32) {
    %c0_i32 = arith.constant 0 : i32
    %c0_i32_0 = arith.constant 0 : i32
    return %arg0, %arg1, %c0_i32 : i32, i32, i32
  }
  func.func @transform_1(%arg0: i32, %arg1: i32) -> (i32, i32) {
    %c0_i32 = arith.constant 0 : i32
    %c0_i32_0 = arith.constant 0 : i32
    %c0_i32_1 = arith.constant 0 : i32
    return %c0_i32, %c0_i32_0 : i32, i32
  }
  func.func @transform_2(%arg0: i32, %arg1: i32) -> (i32, i32) {
    %c0_i32 = arith.constant 0 : i32
    %c0_i32_0 = arith.constant 0 : i32
    %c0_i32_1 = arith.constant 0 : i32
    return %c0_i32, %c0_i32_0 : i32, i32
  }
  func.func @transform_3(%arg0: i32, %arg1: i32) -> (i32, i32, i32) {
    %c0_i32 = arith.constant 0 : i32
    %c0_i32_0 = arith.constant 0 : i32
    %c0_i32_1 = arith.constant 0 : i32
    return %arg0, %c0_i32, %c0_i32_0 : i32, i32, i32
  }
  func.func @transform_4(%arg0: i32, %arg1: i32) -> (i32, i32, i32) {
    %c0_i32 = arith.constant 0 : i32
    %c0_i32_0 = arith.constant 0 : i32
    %c0_i32_1 = arith.constant 0 : i32
    return %arg0, %c0_i32, %c0_i32_0 : i32, i32, i32
  }
  func.func @transform_5(%arg0: i32, %arg1: i32) -> (i32, i32, i32) {
    %c0_i32 = arith.constant 0 : i32
    %c0_i32_0 = arith.constant 0 : i32
    return %arg0, %arg1, %c0_i32 : i32, i32, i32
  }
}

</mosaic_0001>

<llo_original>
// kernel: tpu_custom_call.1
$region0: #{tpu_custom_call.1}
  #allocation0 [shape = 'u32[]', space=smem, size = 0x4, offset = 0x4, fixed_abs, tag = 'smem constant byte address 0x4 - core index']
  #allocation1 [shape = 'u32[144,128]{1,0:T(1,128)}', space=vmem, size = 0x12000, scoped, tag = 'internal scratch']
  %s0 = inlined_call_operand.hbm [shape: bf16[8,16,32], index: 0, kind: input, shape index: {}]
  %s1 = inlined_call_operand.hbm [shape: bf16[32,128], index: 1, kind: input, shape index: {}]
  %s2 = inlined_call_operand.vmem [shape: f32[1,128], index: 2, kind: input, shape index: {}]
  %s3 = inlined_call_operand.hbm [shape: bf16[8,32,128], index: 3, kind: input, shape index: {}]
  %s4 = inlined_call_operand.hbm [shape: f32[8,1,128], index: 4, kind: input, shape index: {}]
  %s5 = inlined_call_operand.hbm [shape: f32[8,16,128], index: 5, kind: output, shape index: {}]
  %s6 = sld [smem:[#allocation0]]
  $region69: #{tpu_custom_call.1} parent=0
    _
  %s8 = ssub.s32 1, %s6
  %s9 = scalar_select 0, %s8, %s6
  $region1: #{tpu_custom_call.1} parent=0
    #allocation2 [shape = 'u8[8192]{0}', space=vmem, size = 0x2000, scoped, tag = 'input window, operand 0']
    #allocation3 [shape = 's32[2]{0}', space=sflag, size = 0x8, scoped, tag = 'scoped memory for tpu_custom_call.1']
    #allocation4 [shape = 's32[2]{0}', space=sflag, size = 0x8, scoped, tag = 'scoped memory for tpu_custom_call.1']
    #allocation5 [shape = 'u8[8192]{0}', space=vmem, size = 0x2000, scoped, tag = 'input window, operand 1, single buffered']
    #allocation6 [shape = 's32[1]{0}', space=sflag, size = 0x4, scoped, tag = 'scoped memory for tpu_custom_call.1']
    #allocation7 [shape = 'u8[16384]{0}', space=vmem, size = 0x4000, scoped, tag = 'input window, operand 3']
    #allocation8 [shape = 'u8[1024]{0}', space=vmem, size = 0x400, scoped, tag = 'input window, operand 4']
    #allocation9 [shape = 'u8[16384]{0}', space=vmem, size = 0x4000, scoped, tag = 'output window, operand 0']
    %10 = vsyncpa [#allocation3], 0
    %s11 = scalar_lea.sflag [#allocation3], 1
    %12 = vsyncpa %s11, 0
    %13 = vsyncpa [#allocation6], 0
    %14 = vsyncpa [#allocation4], 0
    %s15 = scalar_lea.sflag [#allocation4], 1
    %16 = vsyncpa %s15, 0
    loop: start=0, step=1, limit=10
    $region2: #{tpu_custom_call.1} parent=1 // loop_pre_header
      _
    $region3: #{tpu_custom_call.1} parent=1 // loop_header
      %s18 = sphi 0, %s22
      %p19 = scmp.ge.s32.totalorder %s18, 10
      %s25 = sphi 0, %s37
      %s26 = sphi 0, %s33
      %s27 = sphi 0, %s25
      %s28 = sphi 0, %s26
      %s29 = sphi 0, %s27
      %s30 = sphi 0, %s28
      %s42 = sphi 0, %s44
      %s45 = sphi 0, %s42
      %s46 = sphi 0, %s45
      %s62 = sphi 0, %s46
      %s66 = sphi 0, %s66
      %s68 = sphi 0, %s66
      %s69 = sphi 0, %s68
      %s83 = sphi 0, %s69
      %s87 = sphi 0, %s87
      %s89 = sphi 0, %s87
      %s90 = sphi 0, %s89
      %s104 = sphi 0, %s90
      %s110 = sphi 0, %s112
      %s113 = sphi 0, %s110
      %s114 = sphi 0, %s113
      %s130 = sphi 0, %s114
      %s136 = sphi 0, %s138
      %s139 = sphi 0, %s136
      %s140 = sphi 0, %s139
      %s156 = sphi 0, %s140
      %s164 = sphi 0, %s166
      %s167 = sphi 0, %s164
      %s168 = sphi 0, %s167
      %s184 = sphi 0, %s168
    $region4: #{tpu_custom_call.1} parent=1 // loop_header_branch
      %21 = sbr.rel (%p19) target = $region8
    $region5: #{tpu_custom_call.1} parent=1 // loop_body
      %s23 = ssub.s32 %s18, 1
      %s24 = ssub.s32 %s18, 2
      %s31 = sadd.s32 1, %s26
      %p32 = scmp.ge.s32.totalorder %s31, 1
      %s33 = scalar_select %p32, 0, %s31
      %s34 = sadd.s32 1, %s25
      %s35 = scalar_select %p32, %s34, %s25
      %p36 = scmp.ge.s32.totalorder %s35, 8
      %s37 = scalar_select %p36, 0, %s35
      %s38 = ssub.s32 %s25, %s37
      %s39 = ssub.s32 %s26, %s33
      %s40 = sor.u32 %s38, %s39
      %p41 = scmp.eq.s32.totalorder %s40, 0
      %s43 = sadd.s32 %s42, 1
      %s44 = scalar_select %p41, %s42, %s43
      %p47 = pneg %p41
      %p48 = scmp.eq.s32.totalorder %s18, 7
      %p49 = por %p47, %p48
      %p50 = scmp.ne.s32.totalorder %s42, %s45
      %p51 = scmp.eq.s32.totalorder %s18, 0
      %p52 = por %p50, %p51
      %p53 = scmp.ne.s32.totalorder %s42, %s45
      %p54 = scmp.eq.s32.totalorder %s23, 7
      %p55 = por %p53, %p54
      %p56 = scmp.ne.s32.totalorder %s45, %s46
      %p57 = scmp.eq.s32.totalorder %s23, 0
      %p58 = por %p56, %p57
      %p59 = scmp.ne.s32.totalorder %s45, %s46
      %p60 = scmp.eq.s32.totalorder %s24, 7
      %p61 = por %p59, %p60
      %p63 = scmp.ne.s32.totalorder %s46, %s62
      %p64 = scmp.eq.s32.totalorder %s24, 0
      %p65 = por %p63, %p64
      %s67 = sadd.s32 %s66, 1
      %p70 = scmp.eq.s32.totalorder %s18, 7
      %p71 = scmp.ne.s32.totalorder %s66, %s68
      %p72 = scmp.eq.s32.totalorder %s18, 0
      %p73 = por %p71, %p72
      %p74 = scmp.ne.s32.totalorder %s66, %s68
      %p75 = scmp.eq.s32.totalorder %s23, 7
      %p76 = por %p74, %p75
      %p77 = scmp.ne.s32.totalorder %s68, %s69
      %p78 = scmp.eq.s32.totalorder %s23, 0
      %p79 = por %p77, %p78
      %p80 = scmp.ne.s32.totalorder %s68, %s69
      %p81 = scmp.eq.s32.totalorder %s24, 7
      %p82 = por %p80, %p81
      %p84 = scmp.ne.s32.totalorder %s69, %s83
      %p85 = scmp.eq.s32.totalorder %s24, 0
      %p86 = por %p84, %p85
      %s88 = sadd.s32 %s87, 1
      %p91 = scmp.eq.s32.totalorder %s18, 7
      %p92 = scmp.ne.s32.totalorder %s87, %s89
      %p93 = scmp.eq.s32.totalorder %s18, 0
      %p94 = por %p92, %p93
      %p95 = scmp.ne.s32.totalorder %s87, %s89
      %p96 = scmp.eq.s32.totalorder %s23, 7
      %p97 = por %p95, %p96
      %p98 = scmp.ne.s32.totalorder %s89, %s90
      %p99 = scmp.eq.s32.totalorder %s23, 0
      %p100 = por %p98, %p99
      %p101 = scmp.ne.s32.totalorder %s89, %s90
      %p102 = scmp.eq.s32.totalorder %s24, 7
      %p103 = por %p101, %p102
      %p105 = scmp.ne.s32.totalorder %s90, %s104
      %p106 = scmp.eq.s32.totalorder %s24, 0
      %p107 = por %p105, %p106
      %s108 = ssub.s32 %s25, %s37
      %p109 = scmp.eq.s32.totalorder %s108, 0
      %s111 = sadd.s32 %s110, 1
      %s112 = scalar_select %p109, %s110, %s111
      %p115 = pneg %p109
      %p116 = scmp.eq.s32.totalorder %s18, 7
      %p117 = por %p115, %p116
      %p118 = scmp.ne.s32.totalorder %s110, %s113
      %p119 = scmp.eq.s32.totalorder %s18, 0
      %p120 = por %p118, %p119
      %p121 = scmp.ne.s32.totalorder %s110, %s113
      %p122 = scmp.eq.s32.totalorder %s23, 7
      %p123 = por %p121, %p122
      %p124 = scmp.ne.s32.totalorder %s113, %s114
      %p125 = scmp.eq.s32.totalorder %s23, 0
      %p126 = por %p124, %p125
      %p127 = scmp.ne.s32.totalorder %s113, %s114
      %p128 = scmp.eq.s32.totalorder %s24, 7
      %p129 = por %p127, %p128
      %p131 = scmp.ne.s32.totalorder %s114, %s130
      %p132 = scmp.eq.s32.totalorder %s24, 0
      %p133 = por %p131, %p132
      %s134 = ssub.s32 %s25, %s37
      %p135 = scmp.eq.s32.totalorder %s134, 0
      %s137 = sadd.s32 %s136, 1
      %s138 = scalar_select %p135, %s136, %s137
      %p141 = pneg %p135
      %p142 = scmp.eq.s32.totalorder %s18, 7
      %p143 = por %p141, %p142
      %p144 = scmp.ne.s32.totalorder %s136, %s139
      %p145 = scmp.eq.s32.totalorder %s18, 0
      %p146 = por %p144, %p145
      %p147 = scmp.ne.s32.totalorder %s136, %s139
      %p148 = scmp.eq.s32.totalorder %s23, 7
      %p149 = por %p147, %p148
      %p150 = scmp.ne.s32.totalorder %s139, %s140
      %p151 = scmp.eq.s32.totalorder %s23, 0
      %p152 = por %p150, %p151
      %p153 = scmp.ne.s32.totalorder %s139, %s140
      %p154 = scmp.eq.s32.totalorder %s24, 7
      %p155 = por %p153, %p154
      %p157 = scmp.ne.s32.totalorder %s140, %s156
      %p158 = scmp.eq.s32.totalorder %s24, 0
      %p159 = por %p157, %p158
      %s160 = ssub.s32 %s25, %s37
      %s161 = ssub.s32 %s26, %s33
      %s162 = sor.u32 %s160, %s161
      %p163 = scmp.eq.s32.totalorder %s162, 0
      %s165 = sadd.s32 %s164, 1
      %s166 = scalar_select %p163, %s164, %s165
      %p169 = pneg %p163
      %p170 = scmp.eq.s32.totalorder %s18, 7
      %p171 = por %p169, %p170
      %p172 = scmp.ne.s32.totalorder %s164, %s167
      %p173 = scmp.eq.s32.totalorder %s18, 0
      %p174 = por %p172, %p173
      %p175 = scmp.ne.s32.totalorder %s164, %s167
      %p176 = scmp.eq.s32.totalorder %s23, 7
      %p177 = por %p175, %p176
      %p178 = scmp.ne.s32.totalorder %s167, %s168
      %p179 = scmp.eq.s32.totalorder %s23, 0
      %p180 = por %p178, %p179
      %p181 = scmp.ne.s32.totalorder %s167, %s168
      %p182 = scmp.eq.s32.totalorder %s24, 7
      %p183 = por %p181, %p182
      %p185 = scmp.ne.s32.totalorder %s168, %s184
      %p186 = scmp.eq.s32.totalorder %s24, 0
      %p187 = por %p185, %p186
      %p188 = scmp.le.s32.totalorder 1, %s18
      %p189 = scmp.lt.s32.totalorder %s18, 9
      %p190 = pnand %p188, %p189
      %p191 = pneg %p190
      // Predicated region
      $region9: #{tpu_custom_call.1} parent=5 // pred_check
        _
      $region10: #{tpu_custom_call.1} parent=5 // pred_check_branch
        %193 = sbr.rel (%p190) target = $region12
      $region11: #{tpu_custom_call.1} parent=5 // pred_region
        %s194 = ssub.s32 %s18, 1
        // Predicated region
        $region13: #{tpu_custom_call.1} parent=11 // pred_check
          %p195 = pneg %p79
        $region14: #{tpu_custom_call.1} parent=11 // pred_check_branch
          %197 = sbr.rel (%p195) target = $region16
        $region15: #{tpu_custom_call.1} parent=11 // pred_region
          %s199 = ssub.s32 256, 256
          %200 = vsyncadd [#allocation6], %s199
          %s201 = sshll.u32 [#allocation5], 4
          %s202 = int_to_ptr.vmem [resolvable:$true] %s201
          %207 = dma.hbm_to_vmem [thread:$0]  %s1, 256, %s202, [#allocation6], 64, 64, 4
        $region16: #{tpu_custom_call.1} parent=11 // pred_fallthru
          _
        // Predicated region
        $region17: #{tpu_custom_call.1} parent=11 // pred_check
          %p208 = pneg %p100
        $region18: #{tpu_custom_call.1} parent=11 // pred_check_branch
          %210 = sbr.rel (%p208) target = $region20
        $region19: #{tpu_custom_call.1} parent=11 // pred_region
          _
        $region20: #{tpu_custom_call.1} parent=11 // pred_fallthru
          _
      $region12: #{tpu_custom_call.1} parent=5 // pred_fallthru
        _
      %p211 = scmp.lt.s32.totalorder %s18, 8
      // Predicated region
      $region21: #{tpu_custom_call.1} parent=5 // pred_check
        %p212 = pneg %p211
      $region22: #{tpu_custom_call.1} parent=5 // pred_check_branch
        %214 = sbr.rel (%p212) target = $region24
      $region23: #{tpu_custom_call.1} parent=5 // pred_region
        // Predicated region
        $region25: #{tpu_custom_call.1} parent=23 // pred_check
          %p215 = pneg %p52
        $region26: #{tpu_custom_call.1} parent=23 // pred_check_branch
          %217 = sbr.rel (%p215) target = $region28
        $region27: #{tpu_custom_call.1} parent=23 // pred_region
          %s218 = sand.u32 %s18, 1
          %s219 = scalar_lea.sflag [#allocation3], %s218
          %s220 = sand.u32 %s42, 1
          %s221 = smul.addr %s220, 8
          %s222 = scalar_lea.vmem [#allocation2], %s221
          %s223 = smul.u32 2, %s26
          %s225 = ssub.s32 128, 128
          %226 = vsyncadd %s219, %s225
          %s227 = smul.addr %s25, 2
          %s228 = sadd.s32 %s223, %s227
          %s229 = smul.addr %s228, 64
          %s230 = scalar_lea.hbm %s0, %s229
          %s231 = sshll.u32 %s222, 4
          %s232 = int_to_ptr.vmem [resolvable:$true] %s231
          %237 = dma.hbm_to_vmem [thread:$0]  %s230, 128, %s232, %s219, 64, 64, 4
        $region28: #{tpu_custom_call.1} parent=23 // pred_fallthru
          _
        // Predicated region
        $region29: #{tpu_custom_call.1} parent=23 // pred_check
          %p238 = pneg %p120
        $region30: #{tpu_custom_call.1} parent=23 // pred_check_branch
          %240 = sbr.rel (%p238) target = $region32
        $region31: #{tpu_custom_call.1} parent=23 // pred_region
          %s241 = sand.u32 %s18, 1
          %s242 = scalar_lea.sflag [#allocation3], %s241
          %s243 = sand.u32 %s110, 1
          %s244 = smul.addr %s243, 16
          %s245 = scalar_lea.vmem [#allocation7], %s244
          %s247 = ssub.s32 256, 256
          %248 = vsyncadd %s242, %s247
          %s249 = smul.addr %s25, 4
          %s250 = smul.addr %s249, 64
          %s251 = scalar_lea.hbm %s3, %s250
          %s252 = sshll.u32 %s245, 4
          %s253 = int_to_ptr.vmem [resolvable:$true] %s252
          %258 = dma.hbm_to_vmem [thread:$0]  %s251, 256, %s253, %s242, 64, 64, 4
        $region32: #{tpu_custom_call.1} parent=23 // pred_fallthru
          _
        // Predicated region
        $region33: #{tpu_custom_call.1} parent=23 // pred_check
          %p259 = pneg %p146
        $region34: #{tpu_custom_call.1} parent=23 // pred_check_branch
          %261 = sbr.rel (%p259) target = $region36
        $region35: #{tpu_custom_call.1} parent=23 // pred_region
          %s262 = sand.u32 %s18, 1
          %s263 = scalar_lea.sflag [#allocation3], %s262
          %s264 = sand.u32 %s136, 1
          %s265 = scalar_lea.vmem [#allocation8], %s264
          %s267 = ssub.s32 16, 16
          %268 = vsyncadd %s263, %s267
          %s269 = smul.addr %s25, 16
          %s270 = scalar_lea.hbm %s4, %s269
          %s272 = sshll.u32 %s265, 4
          %s273 = int_to_ptr.vmem [resolvable:$true] %s272
          %275 = dma.hbm_to_vmem [thread:$0]  %s270, 16, %s273, %s263
        $region36: #{tpu_custom_call.1} parent=23 // pred_fallthru
          _
      $region24: #{tpu_custom_call.1} parent=5 // pred_fallthru
        _
      %p276 = scmp.le.s32.totalorder 1, %s18
      %p277 = scmp.lt.s32.totalorder %s18, 9
      %p278 = pnand %p276, %p277
      %p279 = pneg %p278
      // Predicated region
      $region37: #{tpu_custom_call.1} parent=5 // pred_check
        _
      $region38: #{tpu_custom_call.1} parent=5 // pred_check_branch
        %281 = sbr.rel (%p278) target = $region40
      $region39: #{tpu_custom_call.1} parent=5 // pred_region
        %s282 = ssub.s32 %s18, 1
        %s283 = sand.u32 %s23, 1
        %s284 = scalar_lea.sflag [#allocation3], %s283
        %s285 = sand.u32 %s45, 1
        %s286 = smul.addr %s285, 8
        %s287 = scalar_lea.vmem [#allocation2], %s286
        // Predicated region
        $region41: #{tpu_custom_call.1} parent=39 // pred_check
          %p288 = pneg %p58
        $region42: #{tpu_custom_call.1} parent=39 // pred_check_branch
          %290 = sbr.rel (%p288) target = $region44
        $region43: #{tpu_custom_call.1} parent=39 // pred_region
          %291 = dma.done %s284, 128
        $region44: #{tpu_custom_call.1} parent=39 // pred_fallthru
          _
        // Predicated region
        $region45: #{tpu_custom_call.1} parent=39 // pred_check
          %p292 = pneg %p79
        $region46: #{tpu_custom_call.1} parent=39 // pred_check_branch
          %294 = sbr.rel (%p292) target = $region48
        $region47: #{tpu_custom_call.1} parent=39 // pred_region
          %295 = dma.done [#allocation6], 256
        $region48: #{tpu_custom_call.1} parent=39 // pred_fallthru
          _
        %s296 = sand.u32 %s23, 1
        %s297 = scalar_lea.sflag [#allocation3], %s296
        %s298 = sand.u32 %s113, 1
        %s299 = smul.addr %s298, 16
        %s300 = scalar_lea.vmem [#allocation7], %s299
        // Predicated region
        $region49: #{tpu_custom_call.1} parent=39 // pred_check
          %p301 = pneg %p126
        $region50: #{tpu_custom_call.1} parent=39 // pred_check_branch
          %303 = sbr.rel (%p301) target = $region52
        $region51: #{tpu_custom_call.1} parent=39 // pred_region
          %304 = dma.done %s297, 256
        $region52: #{tpu_custom_call.1} parent=39 // pred_fallthru
          _
        %s305 = sand.u32 %s23, 1
        %s306 = scalar_lea.sflag [#allocation3], %s305
        %s307 = sand.u32 %s139, 1
        %s308 = scalar_lea.vmem [#allocation8], %s307
        // Predicated region
        $region53: #{tpu_custom_call.1} parent=39 // pred_check
          %p309 = pneg %p152
        $region54: #{tpu_custom_call.1} parent=39 // pred_check_branch
          %311 = sbr.rel (%p309) target = $region56
        $region55: #{tpu_custom_call.1} parent=39 // pred_region
          %312 = dma.done %s306, 16
        $region56: #{tpu_custom_call.1} parent=39 // pred_fallthru
          _
        %s313 = sand.u32 %s23, 1
        %s314 = scalar_lea.sflag [#allocation3], %s313
        %s315 = sand.u32 %s45, 1
        %s316 = smul.addr %s315, 8
        %s317 = scalar_lea.vmem [#allocation2], %s316
        %p318 = pneg %p58
        %p319 = pneg %p55
        %p320 = pneg %p79
        %p321 = pneg %p76
        %p322 = pneg %p100
        %p323 = pneg %p97
        %s324 = sand.u32 %s23, 1
        %s325 = scalar_lea.sflag [#allocation3], %s324
        %s326 = sand.u32 %s113, 1
        %s327 = smul.addr %s326, 16
        %s328 = scalar_lea.vmem [#allocation7], %s327
        %p329 = pneg %p126
        %p330 = pneg %p123
        %s331 = sand.u32 %s23, 1
        %s332 = scalar_lea.sflag [#allocation3], %s331
        %s333 = sand.u32 %s139, 1
        %s334 = scalar_lea.vmem [#allocation8], %s333
        %p335 = pneg %p152
        %p336 = pneg %p149
        %p337 = pneg %p180
        %p338 = pneg %p177
        %s339 = sand.u32 %s167, 1
        %s340 = scalar_lea.sflag [#allocation4], %s339
        %s341 = sand.u32 %s167, 1
        %s342 = smul.addr %s341, 16
        %s343 = scalar_lea.vmem [#allocation9], %s342
        %s344 = smul.u32 2, %s28
        %s345 = smul.u32 2, %s28
        %v347 = vld [vmem:[%s287] sm:$0xf]
        %v348 = vld [vmem:[%s287 + $0x4] sm:$0xf]
        %v349 = vld [vmem:[#allocation5] sm:$0xf]
        %v350 = vld [vmem:[#allocation5 + $0x4] sm:$0xf]
        %v351 = vld [vmem:[#allocation5 + $0x8] sm:$0xf]
        %v352 = vld [vmem:[#allocation5 + $0xc] sm:$0xf]
        %v353 = vld [vmem:[%s2] sm:$0x1]
        %v355 = vlaneseq
        %v356 = vshrl.u32 %v355, 7
        %v357 = vsub.s32 0, %v356
        %v358 = vrot.slane %v353, %v357
        %v362 = vunpack.c.l.b16 %v347
        %v363 = vunpack.c.l.b16 %v348
        %v364 = vpack.c.b16 %v363, %v362
        %v369 = vunpack.c.l.b16 %v349
        %v370 = vunpack.c.l.b16 %v350
        %v371 = vunpack.c.l.b16 %v351
        %v372 = vunpack.c.l.b16 %v352
        %v373 = vpack.c.b16 %v370, %v369
        %v374 = vpack.c.b16 %v372, %v371
        %vm377 = vcmask 261120
        %v379 = vsel %vm377, %v364, 0
        %381 = vmatprep.subr.bf16.mxu0 0
        %382 = vmatpush1.bf16.msra.mxu0 0
        %383 = vmatprep.subr.bf16.mxu0 0
        %384 = vmatpush1.bf16.msra.mxu0 0
        %385 = vmatprep.subr.bf16.mxu0 0
        %386 = vmatpush1.bf16.msra.mxu0 0
        %387 = vmatprep.subr.bf16.mxu0 0
        %388 = vmatpush1.bf16.msra.mxu0 0
        %389 = vmatprep.subr.bf16.mxu0 0
        %390 = vmatpush1.bf16.msra.mxu0 0
        %391 = vmatprep.subr.bf16.mxu0 0
        %392 = vmatpush1.bf16.msra.mxu0 0
        %393 = vmatprep.subr.bf16.mxu0 0
        %394 = vmatpush1.bf16.msra.mxu0 %v374
        %395 = vmatprep.subr.bf16.mxu0 0
        %396 = vmatpush1.bf16.msra.mxu0 %v373
        %397 = vmatprep.subr.bf16.mxu0 0
        %398 = vmatpush2.bf16.msra.mxu0 0
        %399 = vmatprep.subr.bf16.mxu0 0
        %400 = vmatpush2.bf16.msra.mxu0 0
        %401 = vmatprep.subr.bf16.mxu0 0
        %402 = vmatpush2.bf16.msra.mxu0 0
        %403 = vmatprep.subr.bf16.mxu0 0
        %404 = vmatpush2.bf16.msra.mxu0 0
        %405 = vmatprep.subr.bf16.mxu0 0
        %406 = vmatpush2.bf16.msra.mxu0 0
        %407 = vmatprep.subr.bf16.mxu0 0
        %408 = vmatpush2.bf16.msra.mxu0 0
        %409 = vmatprep.subr.bf16.mxu0 0
        %410 = vmatpush2.bf16.msra.mxu0 0
        %411 = vmatprep.subr.bf16.mxu0 0
        %412 = vmatpush2.bf16.msra.mxu0 0
        %413 = vmatprep.mubr.bf16.mxu0 0
        %414 = vmatmul.mubr.bf16.gmra.mxu0 %v379
        %v415 = vpop.f32.mrf.mxu0
        %v416 = vadd.f32 %v358, %v415
        %v417 = vpop.f32.mrf.mxu0
        %v418 = vpop.f32.mrf.mxu0
        %v419 = vadd.f32 %v358, %v418
        %v420 = vpop.f32.mrf.mxu0
        %421 = vdwg.mxu0
        %422 = vmax.xlane.f32.xlu0 %v416
        %v423 = vpop.xlane.xlu0 %422
        %424 = vmax.xlane.f32.xlu0 %v419
        %v425 = vpop.xlane.xlu0 %424
        %v426 = vsub.f32 %v416, %v423
        %v427 = vsub.f32 %v419, %v425
        %v428 = vmul.f32 %v426, 1.442695
        %v429 = vpow.pop %v428
        %v430 = vmul.f32 %v427, 1.442695
        %v431 = vpow.pop %v430
        %432 = vadd.xlane.f32.xlu0 %v429
        %v433 = vpop.xlane.xlu0 %432
        %434 = vadd.xlane.f32.xlu0 %v431
        %v435 = vpop.xlane.xlu0 %434
        %v436 = vlog2.pop %v433
        %v437 = vmul.f32 %v436, 0.6931472
        %v438 = vlog2.pop %v435
        %v439 = vmul.f32 %v438, 0.6931472
        %v440 = vadd.f32 %v423, %v437
        %v441 = vadd.f32 %v425, %v439
        %v442 = vld [vmem:[%s300] sm:$0xf]
        %v443 = vld [vmem:[%s300 + $0x4] sm:$0xf]
        %v444 = vld [vmem:[%s300 + $0x8] sm:$0xf]
        %v445 = vld [vmem:[%s300 + $0xc] sm:$0xf]
        %v446 = vld [vmem:[%s308] sm:$0x1]
        %v448 = vlaneseq
        %v449 = vshrl.u32 %v448, 7
        %v450 = vsub.s32 0, %v449
        %v451 = vrot.slane %v446, %v450
        %v457 = vunpack.c.l.b16 %v442
        %v458 = vunpack.c.l.b16 %v443
        %v459 = vunpack.c.l.b16 %v444
        %v460 = vunpack.c.l.b16 %v445
        %v461 = vpack.c.b16 %v458, %v457
        %v462 = vpack.c.b16 %v460, %v459
        %465 = vmatprep.subr.bf16.mxu0 0
        %466 = vmatpush1.bf16.msra.mxu0 0
        %467 = vmatprep.subr.bf16.mxu0 0
        %468 = vmatpush1.bf16.msra.mxu0 0
        %469 = vmatprep.subr.bf16.mxu0 0
        %470 = vmatpush1.bf16.msra.mxu0 0
        %471 = vmatprep.subr.bf16.mxu0 0
        %472 = vmatpush1.bf16.msra.mxu0 0
        %473 = vmatprep.subr.bf16.mxu0 0
        %474 = vmatpush1.bf16.msra.mxu0 0
        %475 = vmatprep.subr.bf16.mxu0 0
        %476 = vmatpush1.bf16.msra.mxu0 0
        %477 = vmatprep.subr.bf16.mxu0 0
        %478 = vmatpush1.bf16.msra.mxu0 %v462
        %479 = vmatprep.subr.bf16.mxu0 0
        %480 = vmatpush1.bf16.msra.mxu0 %v461
        %481 = vmatprep.subr.bf16.mxu0 0
        %482 = vmatpush2.bf16.msra.mxu0 0
        %483 = vmatprep.subr.bf16.mxu0 0
        %484 = vmatpush2.bf16.msra.mxu0 0
        %485 = vmatprep.subr.bf16.mxu0 0
        %486 = vmatpush2.bf16.msra.mxu0 0
        %487 = vmatprep.subr.bf16.mxu0 0
        %488 = vmatpush2.bf16.msra.mxu0 0
        %489 = vmatprep.subr.bf16.mxu0 0
        %490 = vmatpush2.bf16.msra.mxu0 0
        %491 = vmatprep.subr.bf16.mxu0 0
        %492 = vmatpush2.bf16.msra.mxu0 0
        %493 = vmatprep.subr.bf16.mxu0 0
        %494 = vmatpush2.bf16.msra.mxu0 0
        %495 = vmatprep.subr.bf16.mxu0 0
        %496 = vmatpush2.bf16.msra.mxu0 0
        %497 = vmatprep.mubr.bf16.mxu0 0
        %498 = vmatmul.mubr.bf16.gmra.mxu0 %v379
        %v499 = vpop.f32.mrf.mxu0
        %v500 = vadd.f32 %v451, %v499
        %v501 = vpop.f32.mrf.mxu0
        %v502 = vpop.f32.mrf.mxu0
        %v503 = vadd.f32 %v451, %v502
        %v504 = vpop.f32.mrf.mxu0
        %505 = vdwg.mxu0
        %v506 = vsub.f32 %v500, %v440
        %v507 = vsub.f32 %v503, %v441
        %508 = vst [vmem:[%s343] sm:$0xff] %v506
        %509 = vst [vmem:[%s343 + $0x8] sm:$0xff] %v507
        %s510 = sand.u32 %s167, 1
        %s511 = scalar_lea.sflag [#allocation4], %s510
        %s512 = sand.u32 %s167, 1
        %s513 = smul.addr %s512, 16
        %s514 = scalar_lea.vmem [#allocation9], %s513
        // Predicated region
        $region57: #{tpu_custom_call.1} parent=39 // pred_check
          %p515 = pneg %p177
        $region58: #{tpu_custom_call.1} parent=39 // pred_check_branch
          %517 = sbr.rel (%p515) target = $region60
        $region59: #{tpu_custom_call.1} parent=39 // pred_region
          %s518 = smul.u32 2, %s28
          %s520 = ssub.s32 256, 256
          %521 = vsyncadd %s511, %s520
          %s522 = smul.addr %s27, 2
          %s523 = sadd.s32 %s518, %s522
          %s524 = smul.addr %s523, 128
          %s525 = scalar_lea.hbm %s5, %s524
          %s526 = sshll.u32 %s514, 4
          %s527 = int_to_ptr.vmem [resolvable:$true] %s526
          %532 = dma.vmem_to_hbm [thread:$0]  %s527, 256, %s525, %s511, 128, 128, 8
        $region60: #{tpu_custom_call.1} parent=39 // pred_fallthru
          _
      $region40: #{tpu_custom_call.1} parent=5 // pred_fallthru
        _
      %p533 = scmp.le.s32.totalorder 2, %s18
      // Predicated region
      $region61: #{tpu_custom_call.1} parent=5 // pred_check
        %p534 = pneg %p533
      $region62: #{tpu_custom_call.1} parent=5 // pred_check_branch
        %536 = sbr.rel (%p534) target = $region64
      $region63: #{tpu_custom_call.1} parent=5 // pred_region
        %s537 = ssub.s32 %s18, 2
        // Predicated region
        $region65: #{tpu_custom_call.1} parent=63 // pred_check
          %p538 = pneg %p183
        $region66: #{tpu_custom_call.1} parent=63 // pred_check_branch
          %540 = sbr.rel (%p538) target = $region68
        $region67: #{tpu_custom_call.1} parent=63 // pred_region
          %s541 = sand.u32 %s168, 1
          %s542 = scalar_lea.sflag [#allocation4], %s541
          %s543 = sand.u32 %s168, 1
          %s544 = smul.addr %s543, 16
          %s545 = scalar_lea.vmem [#allocation9], %s544
          %546 = dma.done %s542, 256
        $region68: #{tpu_custom_call.1} parent=63 // pred_fallthru
          _
      $region64: #{tpu_custom_call.1} parent=5 // pred_fallthru
        _
    $region6: #{tpu_custom_call.1} parent=1 // loop_footer
      %s22 = sadd.s32 1, %s18
    $region7: #{tpu_custom_call.1} parent=1 // loop_footer_branch
      %17 = sbr.rel target = $region3
    $region8: #{tpu_custom_call.1} parent=1 // loop_exit
      _
    %547 = vsyncpa [#allocation3], 1
    %s548 = scalar_lea.sflag [#allocation3], 1
    %549 = vsyncpa %s548, 1
    %550 = vsyncpa [#allocation6], 1
    %551 = vsyncpa [#allocation4], 1
    %s552 = scalar_lea.sflag [#allocation4], 1
    %553 = vsyncpa %s552, 1

</llo_original>
